<compile_context>
chip_gen: v6e
topology: v6e:2x2x1
jax: 0.10.0
libtpu: 0.0.40
codegen_flags: <defaults>
</compile_context>

<pallas_src>
import functools

import jax
import jax.numpy as jnp
from jax.experimental import pallas as pl
from jax.experimental.pallas import tpu as pltpu


def _round_up(v: int, m: int) -> int:
    return (v + m - 1) // m * m


def _cdiv(a: int, b: int) -> int:
    return -(-a // b)


# ---------------------------------------------------------------------------
# Kernel: Y = X @ W_all + b_all, tiled over (M, N, K); K is the reduction axis.
# ---------------------------------------------------------------------------
def _fused_linear_kernel(x_ref, w_ref, b_ref, o_ref, acc_ref):
    # x_ref  : (TM, TK)  batch x aggregator tile (compute dtype)
    # w_ref  : (TK, TN)  fused, e-major, pre-transposed weight tile
    # b_ref  : (1, TN)   fused bias tile (f32, broadcasts over sublanes)
    # o_ref  : (TM, TN)  output tile (original dtype), lane-dense last dim
    # acc_ref: (TM, TN)  f32 accumulator scratch, resident across the K axis
    @pl.when(pl.program_id(2) == 0)
    def _():
        acc_ref[...] = jnp.zeros_like(acc_ref)

    acc_ref[...] += jnp.dot(x_ref[...], w_ref[...],
                            preferred_element_type=jnp.float32)

    @pl.when(pl.program_id(2) == pl.num_programs(2) - 1)
    def _():
        o_ref[...] = (acc_ref[...] + b_ref[...]).astype(o_ref.dtype)


# ---------------------------------------------------------------------------
# One-time parameter re-layout (call at init, NOT inside the forward path).
# ---------------------------------------------------------------------------
def fuse_cpc_predictor_params(weights, biases, *, compute_dtype=None, k_tile=512):
    """weights: (T, E, A) per-predictor nn.Linear weights; biases: (T, E).

    Returns fused, padded parameters + static metadata for the forward pass.
    """
    assert k_tile % 128 == 0
    T, E, A = weights.shape
    N = T * E

    # e-major column order: column e*T + t holds weights[t, e, :].
    #   (X @ w_all)[b, e*T + t] = (X @ W[t].T)[b, e]
    # => reshape(B, E, T) directly matches torch.stack(..., axis=2).
    w_all = jnp.transpose(weights.astype(jnp.float32), (2, 1, 0)).reshape(A, N)
    b_all = jnp.transpose(biases.astype(jnp.float32), (1, 0)).reshape(1, N)

    if compute_dtype is not None:
        w_all = w_all.astype(compute_dtype)

    # Lane dim padded to a multiple of 128 (unmasked vst). K padded only if tiled.
    N_pad = _round_up(N, 128)
    if A <= k_tile:
        TK, A_pad = A, A               # K fully in-block, single K grid step
    else:
        TK, A_pad = k_tile, _round_up(A, k_tile)

    if N_pad != N or A_pad != A:
        w_all = jnp.pad(w_all, ((0, A_pad - A), (0, N_pad - N)))
    if N_pad != N:
        b_all = jnp.pad(b_all, ((0, 0), (0, N_pad - N)))

    return dict(w_all=w_all, b_all=b_all, T=T, E=E, N=N,
                A=A, A_pad=A_pad, TK=TK, N_pad=N_pad,
                compute_dtype=compute_dtype)


def _pick_n_tile(n_pad: int, cap: int = 512) -> int:
    # Largest multiple of 128 that divides n_pad and is <= cap.
    best, d = 128, 128
    while d <= min(n_pad, cap):
        if n_pad % d == 0:
            best = d
        d += 128
    return best


def _num_tensorcores() -> int:
    # v7x has 2 TensorCores per chip; v5e/v6e have 1.
    try:
        kind = jax.devices()[0].device_kind.lower()
        if "v7" in kind or "7x" in kind:
            return 2
    except Exception:
        pass
    return 1


# ---------------------------------------------------------------------------
# Forward pass: x (B, A) -> (B, E, T)   (== CPCPredictor.forward layout)
# ---------------------------------------------------------------------------
def cpc_predictor_forward(x, w_all, b_all, *, T, E, N, A, A_pad, TK, N_pad,
                          compute_dtype=None, m_tile_cap=512, min_m_tiles=None):
    B, A_in = x.shape
    assert A_in == A, (A_in, A)
    out_dtype = x.dtype

    if compute_dtype is not None:
        x = x.astype(compute_dtype)

    # Balanced M tiling (no ~all-padding trailing tile); split M into >=2
    # "parallel" tiles on a 2-TC chip so both TensorCores are used.
    if min_m_tiles is None:
        min_m_tiles = 2 if (_num_tensorcores() >= 2 and B >= 16) else 1
    m_tiles = max(_cdiv(B, m_tile_cap), min_m_tiles)
    TM = _round_up(_cdiv(B, m_tiles), 8)
    B_pad = _round_up(B, TM)

    TN = _pick_n_tile(N_pad)

    if B_pad != B or A_pad != A:
        x = jnp.pad(x, ((0, B_pad - B), (0, A_pad - A)))

    grid = (B_pad // TM, N_pad // TN, A_pad // TK)

    # Explicit scoped-VMEM budget: double-buffered X/W/bias inputs + double-buffered
    # output + the f32 accumulator scratch, with 2x headroom, capped under v7x VMEM.
    in_isz = jnp.dtype(x.dtype).itemsize
    out_isz = jnp.dtype(out_dtype).itemsize
    vmem_needed = (2 * (TM * TK + TK * TN) * in_isz
                   + 2 * TN * 4
                   + 2 * TM * TN * out_isz
                   + TM * TN * 4)
    vmem_limit = min(48 << 20, max(8 << 20, 2 * vmem_needed))

    out = pl.pallas_call(
        _fused_linear_kernel,
        out_shape=jax.ShapeDtypeStruct((B_pad, N_pad), out_dtype),
        grid_spec=pltpu.PrefetchScalarGridSpec(
            num_scalar_prefetch=0,
            grid=grid,
            in_specs=[
                pl.BlockSpec((TM, TK), lambda i, j, k: (i, k)),   # X tile
                pl.BlockSpec((TK, TN), lambda i, j, k: (k, j)),   # fused W tile
                pl.BlockSpec((1, TN), lambda i, j, k: (0, j)),    # fused bias tile
            ],
            out_specs=pl.BlockSpec((TM, TN), lambda i, j, k: (i, j)),
            scratch_shapes=[pltpu.VMEM((TM, TN), jnp.float32)],
        ),
        compiler_params=pltpu.CompilerParams(
            dimension_semantics=("parallel", "parallel", "arbitrary"),
            vmem_limit_bytes=vmem_limit,
        ),
    )(x, w_all, b_all)

    if B_pad != B or N_pad != N:
        out = out[:B, :N]
    # e-major fused columns => free reshape to the torch (B, E, T) layout.
    return out.reshape(B, E, T)


def cpc_predictor(x, weights, biases, *, compute_dtype=None):
    """Convenience one-shot wrapper (fuses params per call; prefer hoisting)."""
    p = fuse_cpc_predictor_params(weights, biases, compute_dtype=compute_dtype)
    return cpc_predictor_forward(
        x, p["w_all"], p["b_all"], T=p["T"], E=p["E"], N=p["N"], A=p["A"],
        A_pad=p["A_pad"], TK=p["TK"], N_pad=p["N_pad"],
        compute_dtype=p["compute_dtype"])


def _reference(x, weights, biases):
    ys = [x @ weights[t].T + biases[t] for t in range(weights.shape[0])]
    return jnp.stack(ys, axis=2)


if __name__ == "__main__":
    # Small shapes consistent with the module's forward.
    B = 8                # batch
    aggregator_dim = 32  # A
    encoder_dim = 16     # E
    nb_t_to_predict = 4  # T

    key = jax.random.PRNGKey(0)
    kx, kw, kb = jax.random.split(key, 3)

    x = jax.random.normal(kx, (B, aggregator_dim), dtype=jnp.float32)
    bound = 1.0 / (aggregator_dim ** 0.5)
    weights = jax.random.uniform(
        kw, (nb_t_to_predict, encoder_dim, aggregator_dim),
        minval=-bound, maxval=bound, dtype=jnp.float32)
    biases = jax.random.uniform(
        kb, (nb_t_to_predict, encoder_dim),
        minval=-bound, maxval=bound, dtype=jnp.float32)

    ref = _reference(x, weights, biases)

    # --- f32 path: parameters fused ONCE (init time), forward jitted. ---
    p32 = fuse_cpc_predictor_params(weights, biases)
    fwd32 = jax.jit(functools.partial(
        cpc_predictor_forward, T=p32["T"], E=p32["E"], N=p32["N"], A=p32["A"],
        A_pad=p32["A_pad"], TK=p32["TK"], N_pad=p32["N_pad"],
        compute_dtype=p32["compute_dtype"]))
    out32 = fwd32(x, p32["w_all"], p32["b_all"])
    jax.block_until_ready(out32)
    assert out32.shape == (B, encoder_dim, nb_t_to_predict), out32.shape
    assert jnp.allclose(out32, ref, atol=1e-5, rtol=1e-5), "f32 mismatch vs reference"

    # --- bf16 compute path (v6e/v7x bandwidth/MXU win); f32 accumulation. ---
    p16 = fuse_cpc_predictor_params(weights, biases, compute_dtype=jnp.bfloat16)
    fwd16 = jax.jit(functools.partial(
        cpc_predictor_forward, T=p16["T"], E=p16["E"], N=p16["N"], A=p16["A"],
        A_pad=p16["A_pad"], TK=p16["TK"], N_pad=p16["N_pad"],
        compute_dtype=p16["compute_dtype"]))
    out16 = fwd16(x, p16["w_all"], p16["b_all"])
    jax.block_until_ready(out16)
    assert out16.shape == (B, encoder_dim, nb_t_to_predict), out16.shape
    assert jnp.allclose(out16, ref, atol=5e-2, rtol=5e-2), "bf16 mismatch vs reference"

    print("KERNEL_OK")
</pallas_src>

<mosaic_0001>
module attributes {stable_mosaic.version = 11 : i64} {
  func.func @_fused_linear_kernel(%arg0: i32, %arg1: i32, %arg2: i32, %arg3: memref<8x32xf32, #tpu.memory_space<vmem>>, %arg4: memref<32x128xf32, #tpu.memory_space<vmem>>, %arg5: memref<1x128xf32, #tpu.memory_space<vmem>>, %arg6: memref<8x128xf32, #tpu.memory_space<vmem>>, %arg7: memref<8x128xf32, #tpu.memory_space<vmem>>) attributes {dimension_semantics = [#tpu.dimension_semantics<parallel>, #tpu.dimension_semantics<parallel>, #tpu.dimension_semantics<arbitrary>], iteration_bounds = array<i64: 1, 1, 1>, scalar_prefetch = 0 : i64, scratch_operands = 1 : i64, tpu.core_type = #tpu.core_type<tc>, window_params = [{transform_indices = @transform_0, window_bounds = array<i64: 8, 32>}, {transform_indices = @transform_1, window_bounds = array<i64: 32, 128>}, {transform_indices = @transform_2, window_bounds = array<i64: 1, 128>}, {transform_indices = @transform_3, window_bounds = array<i64: 8, 128>}]} {
    %c0_i32 = arith.constant 0 : i32
    %0 = arith.cmpi eq, %arg2, %c0_i32 : i32
    %1 = arith.extui %0 : i1 to i32
    %c0_i32_0 = arith.constant 0 : i32
    %2 = arith.cmpi ne, %1, %c0_i32_0 : i32
    scf.if %2 {
      %cst_10 = arith.constant 0.000000e+00 : f32
      %12 = vector.broadcast %cst_10 : f32 to vector<8x128xf32>
      %c0_11 = arith.constant 0 : index
      %c0_12 = arith.constant 0 : index
      %13 = vector.load %arg7[%c0_11, %c0_12] : memref<8x128xf32, #tpu.memory_space<vmem>>, vector<8x128xf32>
      tpu.vector_store %arg7[%c0_11, %c0_12], %12 {strides = array<i32>} : memref<8x128xf32, #tpu.memory_space<vmem>>, vector<8x128xf32>,
    } else {
    }
    %c0 = arith.constant 0 : index
    %c0_1 = arith.constant 0 : index
    %3 = vector.load %arg7[%c0, %c0_1] : memref<8x128xf32, #tpu.memory_space<vmem>>, vector<8x128xf32>
    %c0_2 = arith.constant 0 : index
    %c0_3 = arith.constant 0 : index
    %4 = vector.load %arg3[%c0_2, %c0_3] : memref<8x32xf32, #tpu.memory_space<vmem>>, vector<8x32xf32>
    %c0_4 = arith.constant 0 : index
    %c0_5 = arith.constant 0 : index
    %5 = vector.load %arg4[%c0_4, %c0_5] : memref<32x128xf32, #tpu.memory_space<vmem>>, vector<32x128xf32>
    %cst = arith.constant dense<0.000000e+00> : vector<8x128xf32>
    %6 = tpu.matmul %4, %5, %cst {dimension_numbers = #tpu.dot_dimension_numbers<[1], [0], [0], [1], [0, 0, 1, 1], [], []>} : vector<8x32xf32>, vector<32x128xf32>, vector<8x128xf32> -> vector<8x128xf32>
    %7 = arith.addf %3, %6 : vector<8x128xf32>
    %c0_6 = arith.constant 0 : index
    %c0_7 = arith.constant 0 : index
    %8 = vector.load %arg7[%c0_6, %c0_7] : memref<8x128xf32, #tpu.memory_space<vmem>>, vector<8x128xf32>
    tpu.vector_store %arg7[%c0_6, %c0_7], %7 {strides = array<i32>} : memref<8x128xf32, #tpu.memory_space<vmem>>, vector<8x128xf32>,
    %c0_i32_8 = arith.constant 0 : i32
    %9 = arith.cmpi eq, %arg2, %c0_i32_8 : i32
    %10 = arith.extui %9 : i1 to i32
    %c0_i32_9 = arith.constant 0 : i32
    %11 = arith.cmpi ne, %10, %c0_i32_9 : i32
    scf.if %11 {
      %c0_10 = arith.constant 0 : index
      %c0_11 = arith.constant 0 : index
      %12 = vector.load %arg7[%c0_10, %c0_11] : memref<8x128xf32, #tpu.memory_space<vmem>>, vector<8x128xf32>
      %c0_12 = arith.constant 0 : index
      %c0_13 = arith.constant 0 : index
      %13 = vector.load %arg5[%c0_12, %c0_13] : memref<1x128xf32, #tpu.memory_space<vmem>>, vector<1x128xf32>
      %14 = vector.broadcast %13 : vector<1x128xf32> to vector<8x128xf32>
      %15 = arith.addf %12, %14 : vector<8x128xf32>
      %c0_14 = arith.constant 0 : index
      %c0_15 = arith.constant 0 : index
      %16 = vector.load %arg6[%c0_14, %c0_15] : memref<8x128xf32, #tpu.memory_space<vmem>>, vector<8x128xf32>
      tpu.vector_store %arg6[%c0_14, %c0_15], %15 {strides = array<i32>} : memref<8x128xf32, #tpu.memory_space<vmem>>, vector<8x128xf32>,
    } else {
    }
    return
  }
  func.func @transform_0(%arg0: i32, %arg1: i32, %arg2: i32) -> (i32, i32) {
    %c0_i32 = arith.constant 0 : i32
    return %arg0, %arg2 : i32, i32
  }
  func.func @transform_1(%arg0: i32, %arg1: i32, %arg2: i32) -> (i32, i32) {
    %c0_i32 = arith.constant 0 : i32
    return %arg2, %arg1 : i32, i32
  }
  func.func @transform_2(%arg0: i32, %arg1: i32, %arg2: i32) -> (i32, i32) {
    %c0_i32 = arith.constant 0 : i32
    %c0_i32_0 = arith.constant 0 : i32
    return %c0_i32, %arg1 : i32, i32
  }
  func.func @transform_3(%arg0: i32, %arg1: i32, %arg2: i32) -> (i32, i32) {
    %c0_i32 = arith.constant 0 : i32
    return %arg0, %arg1 : i32, i32
  }
}

</mosaic_0001>

<llo_original>
// kernel: cpc_predictor_forward.1
$region0: #{cpc_predictor_forward.1}
  #allocation0 [shape = 'u32[]', space=smem, size = 0x4, offset = 0x4, fixed_abs, tag = 'smem constant byte address 0x4 - core index']
  #allocation1 [shape = 'u32[144,128]{1,0:T(1,128)}', space=vmem, size = 0x12000, scoped, tag = 'internal scratch']
  #allocation2 [shape = 'f32[8,128]{1,0:T(8,128)}', space=vmem, size = 0x1000, scoped, tag = 'scratch operand']
  %s0 = inlined_call_operand.hbm [shape: f32[8,32], index: 0, kind: input, shape index: {}]
  %s1 = inlined_call_operand.hbm [shape: f32[32,128], index: 1, kind: input, shape index: {}]
  %s2 = inlined_call_operand.vmem [shape: f32[1,128], index: 2, kind: input, shape index: {}]
  %s3 = inlined_call_operand.vmem [shape: f32[8,128], index: 3, kind: output, shape index: {}]
  %s4 = sld [smem:[#allocation0]]
  $region38: #{cpc_predictor_forward.1} parent=0
    _
  %s6 = ssub.s32 1, %s4
  %s7 = scalar_select 0, %s6, %s4
  $region1: #{cpc_predictor_forward.1} parent=0
    #allocation3 [shape = 'u8[4096]{0}', space=vmem, size = 0x1000, scoped, tag = 'input window, operand 0, single buffered']
    #allocation4 [shape = 's32[1]{0}', space=sflag, size = 0x4, scoped, tag = 'scoped memory for cpc_predictor_forward.1']
    #allocation5 [shape = 'u8[16384]{0}', space=vmem, size = 0x4000, scoped, tag = 'input window, operand 1, single buffered']
    #allocation6 [shape = 's32[1]{0}', space=sflag, size = 0x4, scoped, tag = 'scoped memory for cpc_predictor_forward.1']
    %8 = vsyncpa [#allocation4], 0
    %9 = vsyncpa [#allocation6], 0
    // Predicated region
    $region2: #{cpc_predictor_forward.1} parent=1 // pred_check
      _
    $region3: #{cpc_predictor_forward.1} parent=1 // pred_check_branch
      %11 = sbr.rel (0) target = $region5
    $region4: #{cpc_predictor_forward.1} parent=1 // pred_region
      %s13 = ssub.s32 128, 128
      %14 = vsyncadd [#allocation4], %s13
      %s16 = sshll.u32 [#allocation3], 4
      %s17 = int_to_ptr.vmem [resolvable:$true] %s16
      %19 = dma.hbm_to_vmem [thread:$0]  %s0, 128, %s17, [#allocation4]
    $region5: #{cpc_predictor_forward.1} parent=1 // pred_fallthru
      _
    // Predicated region
    $region6: #{cpc_predictor_forward.1} parent=1 // pred_check
      _
    $region7: #{cpc_predictor_forward.1} parent=1 // pred_check_branch
      %21 = sbr.rel (0) target = $region9
    $region8: #{cpc_predictor_forward.1} parent=1 // pred_region
      %s23 = ssub.s32 512, 512
      %24 = vsyncadd [#allocation6], %s23
      %s25 = sshll.u32 [#allocation5], 4
      %s26 = int_to_ptr.vmem [resolvable:$true] %s25
      %31 = dma.hbm_to_vmem [thread:$0]  %s1, 512, %s26, [#allocation6], 128, 128, 8
    $region9: #{cpc_predictor_forward.1} parent=1 // pred_fallthru
      _
    // Predicated region
    $region10: #{cpc_predictor_forward.1} parent=1 // pred_check
      _
    $region11: #{cpc_predictor_forward.1} parent=1 // pred_check_branch
      %33 = sbr.rel (0) target = $region13
    $region12: #{cpc_predictor_forward.1} parent=1 // pred_region
      _
    $region13: #{cpc_predictor_forward.1} parent=1 // pred_fallthru
      _
    // Predicated region
    $region14: #{cpc_predictor_forward.1} parent=1 // pred_check
      _
    $region15: #{cpc_predictor_forward.1} parent=1 // pred_check_branch
      %35 = sbr.rel (0) target = $region17
    $region16: #{cpc_predictor_forward.1} parent=1 // pred_region
      %36 = dma.done [#allocation4], 128
    $region17: #{cpc_predictor_forward.1} parent=1 // pred_fallthru
      _
    // Predicated region
    $region18: #{cpc_predictor_forward.1} parent=1 // pred_check
      _
    $region19: #{cpc_predictor_forward.1} parent=1 // pred_check_branch
      %38 = sbr.rel (0) target = $region21
    $region20: #{cpc_predictor_forward.1} parent=1 // pred_region
      %39 = dma.done [#allocation6], 512
    $region21: #{cpc_predictor_forward.1} parent=1 // pred_fallthru
      _
    %p40 = scmp.eq.s32.totalorder 0, 0
    // Predicated region
    $region22: #{cpc_predictor_forward.1} parent=1 // pred_check
      %p41 = pneg %p40
    $region23: #{cpc_predictor_forward.1} parent=1 // pred_check_branch
      %43 = sbr.rel (%p41) target = $region25
    $region24: #{cpc_predictor_forward.1} parent=1 // pred_region
      %44 = vst [vmem:[#allocation2] sm:$0xff] 0.0
    $region25: #{cpc_predictor_forward.1} parent=1 // pred_fallthru
      _
    %v45 = vld [vmem:[#allocation2] sm:$0xff]
    %v46 = vld [vmem:[#allocation3] sm:$0xff]
    %v47 = vld [vmem:[#allocation5] sm:$0xff]
    %v48 = vld [vmem:[#allocation5 + $0x8] sm:$0xff]
    %v49 = vld [vmem:[#allocation5 + $0x10] sm:$0xff]
    %v50 = vld [vmem:[#allocation5 + $0x18] sm:$0xff]
    %vm51 = vcmask 261120
    %v53 = vsel %vm51, %v46, 0
    %55 = vmatprep.subr.mxu0 0.0
    %56 = vmatpush1.msra.mxu0 0.0
    %57 = vmatprep.subr.mxu0 0.0
    %58 = vmatpush1.msra.mxu0 0.0
    %59 = vmatprep.subr.mxu0 0.0
    %60 = vmatpush1.msra.mxu0 0.0
    %61 = vmatprep.subr.mxu0 0.0
    %62 = vmatpush1.msra.mxu0 0.0
    %63 = vmatprep.subr.mxu0 0.0
    %64 = vmatpush1.msra.mxu0 0.0
    %65 = vmatprep.subr.mxu0 0.0
    %66 = vmatpush1.msra.mxu0 0.0
    %67 = vmatprep.subr.mxu0 0.0
    %68 = vmatpush1.msra.mxu0 0.0
    %69 = vmatprep.subr.mxu0 0.0
    %70 = vmatpush1.msra.mxu0 0.0
    %71 = vmatprep.subr.mxu0 0.0
    %72 = vmatpush1.msra.mxu0 0.0
    %73 = vmatprep.subr.mxu0 0.0
    %74 = vmatpush1.msra.mxu0 0.0
    %75 = vmatprep.subr.mxu0 0.0
    %76 = vmatpush1.msra.mxu0 0.0
    %77 = vmatprep.subr.mxu0 0.0
    %78 = vmatpush1.msra.mxu0 0.0
    %79 = vmatprep.subr.mxu0 0.0
    %80 = vmatpush1.msra.mxu0 %v50
    %81 = vmatprep.subr.mxu0 0.0
    %82 = vmatpush1.msra.mxu0 %v49
    %83 = vmatprep.subr.mxu0 0.0
    %84 = vmatpush1.msra.mxu0 %v48
    %85 = vmatprep.subr.mxu0 0.0
    %86 = vmatpush1.msra.mxu0 %v47
    %87 = vmatprep.subr.mxu0 0.0
    %88 = vmatpush2.msra.mxu0 0.0
    %89 = vmatprep.subr.mxu0 0.0
    %90 = vmatpush2.msra.mxu0 0.0
    %91 = vmatprep.subr.mxu0 0.0
    %92 = vmatpush2.msra.mxu0 0.0
    %93 = vmatprep.subr.mxu0 0.0
    %94 = vmatpush2.msra.mxu0 0.0
    %95 = vmatprep.subr.mxu0 0.0
    %96 = vmatpush2.msra.mxu0 0.0
    %97 = vmatprep.subr.mxu0 0.0
    %98 = vmatpush2.msra.mxu0 0.0
    %99 = vmatprep.subr.mxu0 0.0
    %100 = vmatpush2.msra.mxu0 0.0
    %101 = vmatprep.subr.mxu0 0.0
    %102 = vmatpush2.msra.mxu0 0.0
    %103 = vmatprep.subr.mxu0 0.0
    %104 = vmatpush2.msra.mxu0 0.0
    %105 = vmatprep.subr.mxu0 0.0
    %106 = vmatpush2.msra.mxu0 0.0
    %107 = vmatprep.subr.mxu0 0.0
    %108 = vmatpush2.msra.mxu0 0.0
    %109 = vmatprep.subr.mxu0 0.0
    %110 = vmatpush2.msra.mxu0 0.0
    %111 = vmatprep.subr.mxu0 0.0
    %112 = vmatpush2.msra.mxu0 0.0
    %113 = vmatprep.subr.mxu0 0.0
    %114 = vmatpush2.msra.mxu0 0.0
    %115 = vmatprep.subr.mxu0 0.0
    %116 = vmatpush2.msra.mxu0 0.0
    %117 = vmatprep.subr.mxu0 0.0
    %118 = vmatpush2.msra.mxu0 0.0
    %119 = vmatprep.mubr.f32.mxu0 0.0
    %120 = vmatmul.mubr.f32.gmra.mxu0 %v53
    %v121 = vpop.f32.mrf.mxu0
    %v122 = vadd.f32 0.0, %v121
    %v123 = vpop.f32.mrf.mxu0
    %124 = vdwg.mxu0
    %v125 = vadd.f32 %v45, %v122
    %126 = vst [vmem:[#allocation2] sm:$0xff] %v125
    // Predicated region
    $region26: #{cpc_predictor_forward.1} parent=1 // pred_check
      %p127 = pneg %p40
    $region27: #{cpc_predictor_forward.1} parent=1 // pred_check_branch
      %129 = sbr.rel (%p127) target = $region29
    $region28: #{cpc_predictor_forward.1} parent=1 // pred_region
      %v130 = vld [vmem:[#allocation2] sm:$0xff]
      %v131 = vld [vmem:[%s2] sm:$0x1]
      %v133 = vlaneseq
      %v134 = vshrl.u32 %v133, 7
      %v135 = vsub.s32 0, %v134
      %v136 = vrot.slane %v131, %v135
      %v138 = vadd.f32 %v130, %v136
      %139 = vst [vmem:[%s3] sm:$0xff] %v138
    $region29: #{cpc_predictor_forward.1} parent=1 // pred_fallthru
      _
    // Predicated region
    $region30: #{cpc_predictor_forward.1} parent=1 // pred_check
      _
    $region31: #{cpc_predictor_forward.1} parent=1 // pred_check_branch
      %141 = sbr.rel (0) target = $region33
    $region32: #{cpc_predictor_forward.1} parent=1 // pred_region
      _
    $region33: #{cpc_predictor_forward.1} parent=1 // pred_fallthru
      _
    // Predicated region
    $region34: #{cpc_predictor_forward.1} parent=1 // pred_check
      _
    $region35: #{cpc_predictor_forward.1} parent=1 // pred_check_branch
      %143 = sbr.rel (0) target = $region37
    $region36: #{cpc_predictor_forward.1} parent=1 // pred_region
      _
    $region37: #{cpc_predictor_forward.1} parent=1 // pred_fallthru
      _
    %144 = vsyncpa [#allocation4], 1
    %145 = vsyncpa [#allocation6], 1

</llo_original>
